<compile_context>
chip_gen: v7x
topology: tpu7x:2x2x1
jax: 0.10.0
libtpu: 0.0.40
codegen_flags: <defaults>
</compile_context>

<pallas_src>
import jax
import jax.numpy as jnp
from jax.experimental import pallas as pl
from jax.experimental.pallas import tpu as pltpu


# ----------------------------- kernels ------------------------------------


def _ctg_fused_kernel(x_ref, w_ref, b_ref, o_ref):
    """One (tm, tn) output tile, whole reduction in one shot.

    x_ref : (tm, Kd)   activation rows
    w_ref : (Kd, tn)   fused weight slab (W ⊗ A)
    b_ref : (1, tn)    fused bias row
    o_ref : (tm, tn)   output tile (lane-dense)
    """
    acc = jnp.dot(x_ref[...], w_ref[...], preferred_element_type=jnp.float32)
    o_ref[...] = (acc + b_ref[...]).astype(o_ref.dtype)


def _ctg_fused_acc_kernel(x_ref, w_ref, b_ref, o_ref, acc_ref):
    """K-tiled variant: accumulate partial products over the reduction axis.

    Grid = (grid_m, grid_n, grid_k); reduction axis last ("arbitrary").
    """
    k = pl.program_id(2)

    @pl.when(k == 0)
    def _():
        acc_ref[...] = jnp.zeros_like(acc_ref)

    acc_ref[...] += jnp.dot(x_ref[...], w_ref[...],
                            preferred_element_type=jnp.float32)

    @pl.when(k == pl.num_programs(2) - 1)
    def _():
        o_ref[...] = (acc_ref[...] + b_ref[...]).astype(o_ref.dtype)


# --------------------------- tile selection --------------------------------


def _select_tiles(m, kdim, ndim, *, itemsize=4,
                  vmem_budget=24 * 1024 * 1024, max_block_k=None):
    """Pick (tm, tn, tk) so the pipelined blocks fit comfortably in VMEM."""
    # Output (lane) tile: full width if small / not 128-aligned, else a
    # 128-multiple divisor.
    if ndim <= 512 or ndim % 128 != 0:
        tn = ndim
    else:
        tn = ndim
        for cand in (512, 384, 256, 128):
            if ndim % cand == 0:
                tn = cand
                break

    # Row (sublane) tile.
    tm = max(8, min(512, ((m + 7) // 8) * 8))

    def blocks_bytes(tm_, tk_, tn_):
        # double-buffered inputs + double-buffered output + f32 accumulator
        return itemsize * (2 * (tm_ * tk_ + tk_ * tn_ + tn_)
                           + 2 * tm_ * tn_ + tm_ * tn_)

    # Reduction tile: full unless too big; split only into 128-multiples so
    # the x-block last dim stays legal.
    tk = kdim
    if kdim % 128 == 0:
        if max_block_k is not None:
            while tk > max_block_k and tk % 256 == 0:
                tk //= 2
        while blocks_bytes(tm, tk, tn) > vmem_budget and tk % 256 == 0:
            tk //= 2

    # Last resort: shrink the row tile.
    while blocks_bytes(tm, tk, tn) > vmem_budget and tm > 128:
        tm = max(128, tm // 2)

    return tm, tn, tk


# ------------------------------ wrapper ------------------------------------


def conv_temporal_graphical(x, A, weight, bias, s_kernel_size,
                            max_block_k=None):
    """Pallas implementation of ConvTemporalGraphical.forward (t_kernel_size=1).

    x      : (N, C_in, T, V) float32
    A      : (K, V, V)       float32
    weight : (K*C_out, C_in, 1, 1)  (nn.Conv2d weight layout)
    bias   : (K*C_out,)
    returns (out, A) with out : (N, C_out, T, V)
    """
    assert A.shape[0] == s_kernel_size
    n, c_in, t, v = x.shape
    k = s_kernel_size
    kc = weight.shape[0]
    c_out = kc // k
    assert kc == k * c_out

    # ---- one-time parameter fusion (plain JAX, outside the kernel) ----
    w3 = weight.reshape(k, c_out, c_in).astype(jnp.float32)        # (K, C_out, C_in)
    a = A.astype(jnp.float32)                                      # (K, V, V)
    # Wf[(ci,v),(c,w)] = sum_k W[k,c,ci] * A[k,v,w]
    wf = jnp.einsum('kci,kvw->ivcw', w3, a).reshape(c_in * v, c_out * v)
    # b_cw[(c,w)] = sum_k b[k,c] * sum_v A[k,v,w]  (bias enters before the
    # A-contraction in the reference module)
    b2 = bias.reshape(k, c_out).astype(jnp.float32)                # (K, C_out)
    col_sum_a = jnp.sum(a, axis=1)                                 # (K, V)
    bias_cw = jnp.einsum('kc,kw->cw', b2, col_sum_a).reshape(1, c_out * v)

    # ---- activation layout: (N, C_in, T, V) -> (N*T, C_in*V) ----
    x_flat = jnp.transpose(x, (0, 2, 1, 3)).reshape(n * t, c_in * v)

    m = n * t
    kdim = c_in * v
    ndim = c_out * v

    tm, tn, tk = _select_tiles(m, kdim, ndim, max_block_k=max_block_k)
    grid_m = pl.cdiv(m, tm)
    grid_n = ndim // tn
    grid_k = kdim // tk

    m_pad = grid_m * tm
    if m_pad != m:
        x_flat = jnp.pad(x_flat, ((0, m_pad - m), (0, 0)))

    if grid_k == 1:
        out_flat = pl.pallas_call(
            _ctg_fused_kernel,
            out_shape=jax.ShapeDtypeStruct((m_pad, ndim), x.dtype),
            grid_spec=pltpu.PrefetchScalarGridSpec(
                num_scalar_prefetch=0,
                grid=(grid_m, grid_n),
                in_specs=[
                    pl.BlockSpec((tm, kdim), lambda i, j: (i, 0)),
                    pl.BlockSpec((kdim, tn), lambda i, j: (0, j)),
                    pl.BlockSpec((1, tn), lambda i, j: (0, j)),
                ],
                out_specs=pl.BlockSpec((tm, tn), lambda i, j: (i, j)),
            ),
            compiler_params=pltpu.CompilerParams(
                dimension_semantics=("parallel", "parallel")),
        )(x_flat, wf, bias_cw)
    else:
        out_flat = pl.pallas_call(
            _ctg_fused_acc_kernel,
            out_shape=jax.ShapeDtypeStruct((m_pad, ndim), x.dtype),
            grid_spec=pltpu.PrefetchScalarGridSpec(
                num_scalar_prefetch=0,
                grid=(grid_m, grid_n, grid_k),
                in_specs=[
                    pl.BlockSpec((tm, tk), lambda i, j, kk: (i, kk)),
                    pl.BlockSpec((tk, tn), lambda i, j, kk: (kk, j)),
                    pl.BlockSpec((1, tn), lambda i, j, kk: (0, j)),
                ],
                out_specs=pl.BlockSpec((tm, tn), lambda i, j, kk: (i, j)),
                scratch_shapes=[pltpu.VMEM((tm, tn), jnp.float32)],
            ),
            compiler_params=pltpu.CompilerParams(
                dimension_semantics=("parallel", "parallel", "arbitrary")),
        )(x_flat, wf, bias_cw)

    out = out_flat[:m].reshape(n, t, c_out, v)
    out = jnp.transpose(out, (0, 2, 1, 3))     # -> (N, C_out, T, V)
    return out, A


# ----------------------------- reference -----------------------------------


def _reference(x, A, weight, bias, s_kernel_size):
    """Pure-jnp reference mirroring the PyTorch module."""
    n, c_in, t, v = x.shape
    k = s_kernel_size
    c_out = weight.shape[0] // k
    w2d = weight.reshape(k * c_out, c_in)
    y = jnp.einsum('oc,nctv->notv', w2d, x) + bias[None, :, None, None]
    y = y.reshape(n, k, c_out, t, v)
    out = jnp.einsum('nkctv,kvw->nctw', y, A)
    return out


def _make_inputs(key, n, c_in, c_out, t, v, k):
    kx, ka, kw, kb = jax.random.split(key, 4)
    x = jax.random.normal(kx, (n, c_in, t, v), dtype=jnp.float32)
    A = jax.random.normal(ka, (k, v, v), dtype=jnp.float32)
    # Deterministic Conv2d-style init: U(-bound, bound), bound = 1/sqrt(fan_in).
    bound = 1.0 / (c_in ** 0.5)
    weight = jax.random.uniform(kw, (k * c_out, c_in, 1, 1),
                                minval=-bound, maxval=bound, dtype=jnp.float32)
    bias = jax.random.uniform(kb, (k * c_out,),
                              minval=-bound, maxval=bound, dtype=jnp.float32)
    return x, A, weight, bias


if __name__ == "__main__":
    key = jax.random.PRNGKey(0)
    k1, k2 = jax.random.split(key)

    # --- primary small case (single-shot reduction path) ---
    N, C_IN, C_OUT, T, V, K = 2, 4, 8, 16, 16, 3
    x, A, weight, bias = _make_inputs(k1, N, C_IN, C_OUT, T, V, K)
    out, A_out = conv_temporal_graphical(x, A, weight, bias, s_kernel_size=K)
    out = jax.block_until_ready(out)
    ref = _reference(x, A, weight, bias, s_kernel_size=K)
    assert out.shape == (N, C_OUT, T, V)
    assert A_out.shape == (K, V, V)
    assert jnp.allclose(out, ref, atol=1e-4, rtol=1e-4), "mismatch (fused path)"

    # --- secondary small case forcing the K-tiled accumulator path ---
    N2, C_IN2, C_OUT2, T2, V2, K2 = 2, 16, 8, 8, 16, 2     # kdim = 256 -> tk = 128
    x2, A2, w2, b2 = _make_inputs(k2, N2, C_IN2, C_OUT2, T2, V2, K2)
    out2, _ = conv_temporal_graphical(x2, A2, w2, b2, s_kernel_size=K2,
                                      max_block_k=128)
    out2 = jax.block_until_ready(out2)
    ref2 = _reference(x2, A2, w2, b2, s_kernel_size=K2)
    assert out2.shape == (N2, C_OUT2, T2, V2)
    assert jnp.allclose(out2, ref2, atol=1e-4, rtol=1e-4), "mismatch (acc path)"

    print("KERNEL_OK")
</pallas_src>

<mosaic_0001>
module attributes {stable_mosaic.version = 11 : i64} {
  func.func @_ctg_fused_kernel(%arg0: i32, %arg1: i32, %arg2: memref<32x64xf32, #tpu.memory_space<vmem>>, %arg3: memref<64x128xf32, #tpu.memory_space<vmem>>, %arg4: memref<1x128xf32, #tpu.memory_space<vmem>>, %arg5: memref<32x128xf32, #tpu.memory_space<vmem>>) attributes {dimension_semantics = [#tpu.dimension_semantics<parallel>, #tpu.dimension_semantics<parallel>], iteration_bounds = array<i64: 1, 1>, scalar_prefetch = 0 : i64, scratch_operands = 0 : i64, tpu.core_type = #tpu.core_type<tc>, window_params = [{transform_indices = @transform_0, window_bounds = array<i64: 32, 64>}, {transform_indices = @transform_1, window_bounds = array<i64: 64, 128>}, {transform_indices = @transform_2, window_bounds = array<i64: 1, 128>}, {transform_indices = @transform_3, window_bounds = array<i64: 32, 128>}]} {
    %c0 = arith.constant 0 : index
    %c0_0 = arith.constant 0 : index
    %0 = vector.load %arg2[%c0, %c0_0] : memref<32x64xf32, #tpu.memory_space<vmem>>, vector<32x64xf32>
    %c0_1 = arith.constant 0 : index
    %c0_2 = arith.constant 0 : index
    %1 = vector.load %arg3[%c0_1, %c0_2] : memref<64x128xf32, #tpu.memory_space<vmem>>, vector<64x128xf32>
    %cst = arith.constant dense<0.000000e+00> : vector<32x128xf32>
    %2 = tpu.matmul %0, %1, %cst {dimension_numbers = #tpu.dot_dimension_numbers<[1], [0], [0], [1], [0, 0, 1, 1], [], []>} : vector<32x64xf32>, vector<64x128xf32>, vector<32x128xf32> -> vector<32x128xf32>
    %c0_3 = arith.constant 0 : index
    %c0_4 = arith.constant 0 : index
    %3 = vector.load %arg4[%c0_3, %c0_4] : memref<1x128xf32, #tpu.memory_space<vmem>>, vector<1x128xf32>
    %4 = vector.broadcast %3 : vector<1x128xf32> to vector<32x128xf32>
    %5 = arith.addf %2, %4 : vector<32x128xf32>
    %c0_5 = arith.constant 0 : index
    %c0_6 = arith.constant 0 : index
    %6 = vector.load %arg5[%c0_5, %c0_6] : memref<32x128xf32, #tpu.memory_space<vmem>>, vector<32x128xf32>
    tpu.vector_store %arg5[%c0_5, %c0_6], %5 {strides = array<i32>} : memref<32x128xf32, #tpu.memory_space<vmem>>, vector<32x128xf32>,
    return
  }
  func.func @transform_0(%arg0: i32, %arg1: i32) -> (i32, i32) {
    %c0_i32 = arith.constant 0 : i32
    %c0_i32_0 = arith.constant 0 : i32
    return %arg0, %c0_i32 : i32, i32
  }
  func.func @transform_1(%arg0: i32, %arg1: i32) -> (i32, i32) {
    %c0_i32 = arith.constant 0 : i32
    %c0_i32_0 = arith.constant 0 : i32
    return %c0_i32, %arg1 : i32, i32
  }
  func.func @transform_2(%arg0: i32, %arg1: i32) -> (i32, i32) {
    %c0_i32 = arith.constant 0 : i32
    %c0_i32_0 = arith.constant 0 : i32
    return %c0_i32, %arg1 : i32, i32
  }
  func.func @transform_3(%arg0: i32, %arg1: i32) -> (i32, i32) {
    %c0_i32 = arith.constant 0 : i32
    return %arg0, %arg1 : i32, i32
  }
}

</mosaic_0001>

<llo_original>
// kernel: tpu_custom_call.1
$region0: #{tpu_custom_call.1}
  #allocation0 [shape = 'u32[]', space=smem, size = 0x4, offset = 0x4, fixed_abs, tag = 'smem constant byte address 0x4 - core index']
  #allocation1 [shape = 'u32[144,128]{1,0:T(1,128)}', space=vmem, size = 0x12000, scoped, tag = 'internal scratch']
  %s0 = inlined_call_operand.hbm [shape: f32[32,64], index: 0, kind: input, shape index: {}]
  %s1 = inlined_call_operand.hbm [shape: f32[64,128], index: 1, kind: input, shape index: {}]
  %s2 = inlined_call_operand.vmem [shape: f32[1,128], index: 2, kind: input, shape index: {}]
  %s3 = inlined_call_operand.hbm [shape: f32[32,128], index: 3, kind: output, shape index: {}]
  %s4 = sld [smem:[#allocation0]]
  $region30: #{tpu_custom_call.1} parent=0
    _
  %s6 = ssub.s32 1, %s4
  %s7 = scalar_select 0, %s6, %s4
  $region1: #{tpu_custom_call.1} parent=0
    #allocation2 [shape = 'u8[16384]{0}', space=vmem, size = 0x4000, scoped, tag = 'input window, operand 0, single buffered']
    #allocation3 [shape = 's32[1]{0}', space=sflag, size = 0x4, scoped, tag = 'scoped memory for tpu_custom_call.1']
    #allocation4 [shape = 's32[1]{0}', space=sflag, size = 0x4, scoped, tag = 'scoped memory for tpu_custom_call.1']
    #allocation5 [shape = 'u8[32768]{0}', space=vmem, size = 0x8000, scoped, tag = 'input window, operand 1, single buffered']
    #allocation6 [shape = 's32[1]{0}', space=sflag, size = 0x4, scoped, tag = 'scoped memory for tpu_custom_call.1']
    #allocation7 [shape = 'u8[16384]{0}', space=vmem, size = 0x4000, scoped, tag = 'output window, operand 0, single buffered']
    %8 = vsyncpa [#allocation3], 0
    %9 = vsyncpa [#allocation6], 0
    %10 = vsyncpa [#allocation4], 0
    // Predicated region
    $region2: #{tpu_custom_call.1} parent=1 // pred_check
      _
    $region3: #{tpu_custom_call.1} parent=1 // pred_check_branch
      %12 = sbr.rel (0) target = $region5
    $region4: #{tpu_custom_call.1} parent=1 // pred_region
      %s14 = ssub.s32 512, 512
      %15 = vsyncadd [#allocation3], %s14
      %s16 = sshll.u32 [#allocation2], 4
      %s17 = int_to_ptr.vmem [resolvable:$true] %s16
      %22 = dma.hbm_to_vmem [thread:$0]  %s0, 512, %s17, [#allocation3], 128, 128, 8
    $region5: #{tpu_custom_call.1} parent=1 // pred_fallthru
      _
    // Predicated region
    $region6: #{tpu_custom_call.1} parent=1 // pred_check
      _
    $region7: #{tpu_custom_call.1} parent=1 // pred_check_branch
      %24 = sbr.rel (0) target = $region9
    $region8: #{tpu_custom_call.1} parent=1 // pred_region
      %s26 = ssub.s32 1024, 1024
      %27 = vsyncadd [#allocation6], %s26
      %s28 = sshll.u32 [#allocation5], 4
      %s29 = int_to_ptr.vmem [resolvable:$true] %s28
      %34 = dma.hbm_to_vmem [thread:$0]  %s1, 1024, %s29, [#allocation6], 128, 128, 8
    $region9: #{tpu_custom_call.1} parent=1 // pred_fallthru
      _
    // Predicated region
    $region10: #{tpu_custom_call.1} parent=1 // pred_check
      _
    $region11: #{tpu_custom_call.1} parent=1 // pred_check_branch
      %36 = sbr.rel (0) target = $region13
    $region12: #{tpu_custom_call.1} parent=1 // pred_region
      _
    $region13: #{tpu_custom_call.1} parent=1 // pred_fallthru
      _
    // Predicated region
    $region14: #{tpu_custom_call.1} parent=1 // pred_check
      _
    $region15: #{tpu_custom_call.1} parent=1 // pred_check_branch
      %38 = sbr.rel (0) target = $region17
    $region16: #{tpu_custom_call.1} parent=1 // pred_region
      %39 = dma.done [#allocation3], 512
    $region17: #{tpu_custom_call.1} parent=1 // pred_fallthru
      _
    // Predicated region
    $region18: #{tpu_custom_call.1} parent=1 // pred_check
      _
    $region19: #{tpu_custom_call.1} parent=1 // pred_check_branch
      %41 = sbr.rel (0) target = $region21
    $region20: #{tpu_custom_call.1} parent=1 // pred_region
      %42 = dma.done [#allocation6], 1024
    $region21: #{tpu_custom_call.1} parent=1 // pred_fallthru
      _
    %v43 = vld [vmem:[#allocation2] sm:$0xff]
    %v44 = vld [vmem:[#allocation2 + $0x8] sm:$0xff]
    %v45 = vld [vmem:[#allocation2 + $0x10] sm:$0xff]
    %v46 = vld [vmem:[#allocation2 + $0x18] sm:$0xff]
    %v47 = vld [vmem:[#allocation5] sm:$0xff]
    %v48 = vld [vmem:[#allocation5 + $0x8] sm:$0xff]
    %v49 = vld [vmem:[#allocation5 + $0x10] sm:$0xff]
    %v50 = vld [vmem:[#allocation5 + $0x18] sm:$0xff]
    %v51 = vld [vmem:[#allocation5 + $0x20] sm:$0xff]
    %v52 = vld [vmem:[#allocation5 + $0x28] sm:$0xff]
    %v53 = vld [vmem:[#allocation5 + $0x30] sm:$0xff]
    %v54 = vld [vmem:[#allocation5 + $0x38] sm:$0xff]
    %v55 = vld [vmem:[%s2] sm:$0x1]
    %v57 = vlaneseq
    %v58 = vshrl.u32 %v57, 7
    %v59 = vsub.s32 0, %v58
    %v60 = vrot.slane %v55, %v59
    %vm62 = vcmask 523264
    %v64 = vsel %vm62, %v43, 0
    %v67 = vsel %vm62, %v44, 0
    %v70 = vsel %vm62, %v45, 0
    %v73 = vsel %vm62, %v46, 0
    %75 = vmatprep.subr.mxu0 0.0
    %76 = vmatpush1.msra.mxu0 %v47
    %77 = vmatprep.subr.mxu0 0.0
    %78 = vmatpush1.msra.mxu0 %v48
    %79 = vmatprep.subr.mxu0 0.0
    %80 = vmatpush1.msra.mxu0 %v49
    %81 = vmatprep.subr.mxu0 0.0
    %82 = vmatpush1.msra.mxu0 %v50
    %83 = vmatprep.subr.mxu0 0.0
    %84 = vmatpush1.msra.mxu0 %v51
    %85 = vmatprep.subr.mxu0 0.0
    %86 = vmatpush1.msra.mxu0 %v52
    %87 = vmatprep.subr.mxu0 0.0
    %88 = vmatpush1.msra.mxu0 %v53
    %89 = vmatprep.subr.mxu0 0.0
    %90 = vmatpush1.msra.mxu0 %v54
    %91 = vmatprep.subr.mxu0 0.0
    %92 = vmatpush1.msra.mxu0 0.0
    %93 = vmatprep.subr.mxu0 0.0
    %94 = vmatpush1.msra.mxu0 0.0
    %95 = vmatprep.subr.mxu0 0.0
    %96 = vmatpush1.msra.mxu0 0.0
    %97 = vmatprep.subr.mxu0 0.0
    %98 = vmatpush1.msra.mxu0 0.0
    %99 = vmatprep.subr.mxu0 0.0
    %100 = vmatpush1.msra.mxu0 0.0
    %101 = vmatprep.subr.mxu0 0.0
    %102 = vmatpush1.msra.mxu0 0.0
    %103 = vmatprep.subr.mxu0 0.0
    %104 = vmatpush1.msra.mxu0 0.0
    %105 = vmatprep.subr.mxu0 0.0
    %106 = vmatpush1.msra.mxu0 0.0
    %107 = vmatprep.subr.mxu0 0.0
    %108 = vmatpush1.msra.mxu0 0.0
    %109 = vmatprep.subr.mxu0 0.0
    %110 = vmatpush1.msra.mxu0 0.0
    %111 = vmatprep.subr.mxu0 0.0
    %112 = vmatpush1.msra.mxu0 0.0
    %113 = vmatprep.subr.mxu0 0.0
    %114 = vmatpush1.msra.mxu0 0.0
    %115 = vmatprep.subr.mxu0 0.0
    %116 = vmatpush1.msra.mxu0 0.0
    %117 = vmatprep.subr.mxu0 0.0
    %118 = vmatpush1.msra.mxu0 0.0
    %119 = vmatprep.subr.mxu0 0.0
    %120 = vmatpush1.msra.mxu0 0.0
    %121 = vmatprep.subr.mxu0 0.0
    %122 = vmatpush1.msra.mxu0 0.0
    %123 = vmatprep.subr.mxu0 0.0
    %124 = vmatpush1.msra.mxu0 0.0
    %125 = vmatprep.subr.mxu0 0.0
    %126 = vmatpush1.msra.mxu0 0.0
    %127 = vmatprep.subr.mxu0 0.0
    %128 = vmatpush1.msra.mxu0 0.0
    %129 = vmatprep.subr.mxu0 0.0
    %130 = vmatpush1.msra.mxu0 0.0
    %131 = vmatprep.subr.mxu0 0.0
    %132 = vmatpush1.msra.mxu0 0.0
    %133 = vmatprep.subr.mxu0 0.0
    %134 = vmatpush1.msra.mxu0 0.0
    %135 = vmatprep.subr.mxu0 0.0
    %136 = vmatpush1.msra.mxu0 0.0
    %137 = vmatprep.subr.mxu0 0.0
    %138 = vmatpush1.msra.mxu0 0.0
    %139 = vmatprep.mubr.f32.mxu0 0.0
    %140 = vmatmul.mubr.f32.gmra.mrb[0].mxu0 %v64
    %v141 = vpop.f32.mrb[0].mxu0
    %v142 = vadd.f32 %v60, %v141
    %v143 = vpop.f32.mrb[0].mxu0
    %144 = vmatprep.mubr.f32.mxu0 0.0
    %145 = vmatmul.mubr.f32.gmra.mrb[0].mxu0 %v67
    %v146 = vpop.f32.mrb[0].mxu0
    %v147 = vadd.f32 %v60, %v146
    %v148 = vpop.f32.mrb[0].mxu0
    %149 = vmatprep.mubr.f32.mxu0 0.0
    %150 = vmatmul.mubr.f32.gmra.mrb[0].mxu0 %v70
    %v151 = vpop.f32.mrb[0].mxu0
    %v152 = vadd.f32 %v60, %v151
    %v153 = vpop.f32.mrb[0].mxu0
    %154 = vmatprep.mubr.f32.mxu0 0.0
    %155 = vmatmul.mubr.f32.gmra.mrb[0].mxu0 %v73
    %v156 = vpop.f32.mrb[0].mxu0
    %v157 = vadd.f32 %v60, %v156
    %v158 = vpop.f32.mrb[0].mxu0
    %159 = vdwg.mxu0
    %160 = vst [vmem:[#allocation7] sm:$0xff] %v142
    %161 = vst [vmem:[#allocation7 + $0x8] sm:$0xff] %v147
    %162 = vst [vmem:[#allocation7 + $0x10] sm:$0xff] %v152
    %163 = vst [vmem:[#allocation7 + $0x18] sm:$0xff] %v157
    // Predicated region
    $region22: #{tpu_custom_call.1} parent=1 // pred_check
      _
    $region23: #{tpu_custom_call.1} parent=1 // pred_check_branch
      %165 = sbr.rel (0) target = $region25
    $region24: #{tpu_custom_call.1} parent=1 // pred_region
      %s167 = ssub.s32 512, 512
      %168 = vsyncadd [#allocation4], %s167
      %s169 = sshll.u32 [#allocation7], 4
      %s170 = int_to_ptr.vmem [resolvable:$true] %s169
      %175 = dma.vmem_to_hbm [thread:$0]  %s170, 512, %s3, [#allocation4], 128, 128, 8
    $region25: #{tpu_custom_call.1} parent=1 // pred_fallthru
      _
    // Predicated region
    $region26: #{tpu_custom_call.1} parent=1 // pred_check
      _
    $region27: #{tpu_custom_call.1} parent=1 // pred_check_branch
      %177 = sbr.rel (0) target = $region29
    $region28: #{tpu_custom_call.1} parent=1 // pred_region
      %178 = dma.done [#allocation4], 512
    $region29: #{tpu_custom_call.1} parent=1 // pred_fallthru
      _
    %179 = vsyncpa [#allocation3], 1
    %180 = vsyncpa [#allocation6], 1
    %181 = vsyncpa [#allocation4], 1

</llo_original>
